<compile_context>
chip_gen: v5e
topology: v5e:2x2
jax: 0.10.0
libtpu: 0.0.40
codegen_flags: <defaults>
</compile_context>

<pallas_src>
import jax
import jax.numpy as jnp
from jax.experimental import pallas as pl
from jax.experimental.pallas import tpu as pltpu

LANE = 128


def _round_up(n: int, m: int) -> int:
    return ((n + m - 1) // m) * m


def _pad_to(a, shape):
    return jnp.pad(a, [(0, t - s) for s, t in zip(a.shape, shape)])


def mlp_kernel(x_ref, w1_ref, b1_ref, w2_ref, b2_ref, w3_ref, b3_ref, o_ref):
    x = x_ref[...]        # (TILE_B, 4)
    w1 = w1_ref[...]      # (4, 128)

    # fc1 + relu: K=4 contraction done as 4 broadcast-FMAs on the VPU
    # (a 4-deep MXU pass would waste an entire push/pop for 4 useful rows).
    acc = x[:, 0:1] * w1[0:1, :]
    for k in range(1, x.shape[1]):          # static, unrolled (K=4)
        acc = acc + x[:, k:k + 1] * w1[k:k + 1, :]
    h1 = jnp.maximum(acc + b1_ref[...], 0.0)             # (TILE_B, 128)

    # fc2 + relu (MXU, f32 accumulation)
    h2 = jnp.dot(h1, w2_ref[...], preferred_element_type=jnp.float32)
    h2 = jnp.maximum(h2 + b2_ref[...], 0.0)              # (TILE_B, 128)

    # fc3 (num_class == 1): VPU multiply + cross-lane reduce instead of an MXU
    # pass with a single useful output column; stores a narrow (TILE_B, 1)
    # column (no 128-wide output padding / HBM write amplification).
    o = jnp.sum(h2 * w3_ref[...], axis=1, keepdims=True) + b3_ref[...]
    o_ref[...] = o.astype(o_ref.dtype)


def prepare_params(params):
    """Pad params to lane-dense shapes ONCE (hoisted out of the forward path).

    Zero-padded weight columns / bias entries contribute nothing through ReLU
    and the downstream zero-padded rows, so results match the reference.
    """
    w1, b1, w2, b2, w3, b3 = params
    K, H1 = w1.shape
    H2, NC = w3.shape
    assert NC == 1, "fc3 reduce path assumes num_class == 1"
    H1p, H2p = _round_up(H1, LANE), _round_up(H2, LANE)
    w1p = _pad_to(w1, (K, H1p))            # (4, 128)
    b1p = _pad_to(b1, (1, H1p))            # (1, 128)
    w2p = _pad_to(w2, (H1p, H2p))          # (128, 128)
    b2p = _pad_to(b2, (1, H2p))            # (1, 128)
    w3p = _pad_to(w3.T, (1, H2p))          # (1, 128) row vector for lane-reduce
    b3p = b3                               # (1, 1)
    return (w1p, b1p, w2p, b2p, w3p, b3p)


def dnn_forward(x, padded_params, tile_b=4096):
    w1p, b1p, w2p, b2p, w3p, b3p = padded_params
    B, K = x.shape

    # Batch tiling: one big tile (per-grid-step overhead dominates this tiny
    # per-tile workload), capped at ceil(B/2) rounded to 8 sublanes so large
    # batches split into >=2 "parallel" blocks (both v7x TensorCores used).
    # No input padding: a partial last tile reads OOB rows (row-independent
    # garbage) and Pallas clips the corresponding output writes.
    tile_b = max(8, min(tile_b, _round_up(pl.cdiv(B, 2), 8)))
    grid = (pl.cdiv(B, tile_b),)

    const = lambda a: pl.BlockSpec(a.shape, lambda i: (0, 0))  # VMEM-resident

    return pl.pallas_call(
        mlp_kernel,
        out_shape=jax.ShapeDtypeStruct((B, 1), jnp.float32),
        grid=grid,
        in_specs=[
            pl.BlockSpec((tile_b, K), lambda i: (i, 0)),   # x tile (double-buffered)
            const(w1p), const(b1p),
            const(w2p), const(b2p),
            const(w3p), const(b3p),
        ],
        out_specs=pl.BlockSpec((tile_b, 1), lambda i: (i, 0)),
        compiler_params=pltpu.CompilerParams(
            dimension_semantics=("parallel",)),
    )(x, w1p, b1p, w2p, b2p, w3p, b3p)


def init_linear(key, fan_in, fan_out):
    # PyTorch nn.Linear default init: U(-1/sqrt(fan_in), 1/sqrt(fan_in))
    kw, kb = jax.random.split(key)
    bound = 1.0 / jnp.sqrt(float(fan_in))
    # stored as (in, out) == transpose of PyTorch's (out, in) weight
    w = jax.random.uniform(kw, (fan_in, fan_out), jnp.float32, -bound, bound)
    b = jax.random.uniform(kb, (1, fan_out), jnp.float32, -bound, bound)
    return w, b


def reference_forward(x, params):
    w1, b1, w2, b2, w3, b3 = params
    h = jnp.maximum(x @ w1 + b1, 0.0)
    h = jnp.maximum(h @ w2 + b2, 0.0)
    return h @ w3 + b3


if __name__ == "__main__":
    key = jax.random.PRNGKey(0)
    k1, k2, k3, kx = jax.random.split(key, 4)

    num_class = 1
    w1, b1 = init_linear(k1, 4, 120)
    w2, b2 = init_linear(k2, 120, 84)
    w3, b3 = init_linear(k3, 84, num_class)
    params = (w1, b1, w2, b2, w3, b3)
    padded_params = prepare_params(params)   # pad once, reuse every call

    batch = 8
    x = jax.random.normal(kx, (batch, 4), jnp.float32)

    out = dnn_forward(x, padded_params)
    out = jax.block_until_ready(out)

    ref = reference_forward(x, params)
    assert out.shape == (batch, num_class)
    assert jnp.allclose(out, ref, atol=1e-5, rtol=1e-5), "mismatch vs reference"

    print("KERNEL_OK")
</pallas_src>

<mosaic_0001>
module attributes {stable_mosaic.version = 11 : i64} {
  func.func @mlp_kernel(%arg0: i32, %arg1: memref<8x4xf32, #tpu.memory_space<vmem>>, %arg2: memref<4x128xf32, #tpu.memory_space<vmem>>, %arg3: memref<1x128xf32, #tpu.memory_space<vmem>>, %arg4: memref<128x128xf32, #tpu.memory_space<vmem>>, %arg5: memref<1x128xf32, #tpu.memory_space<vmem>>, %arg6: memref<1x128xf32, #tpu.memory_space<vmem>>, %arg7: memref<1x1xf32, #tpu.memory_space<vmem>>, %arg8: memref<8x1xf32, #tpu.memory_space<vmem>>) attributes {dimension_semantics = [#tpu.dimension_semantics<parallel>], iteration_bounds = array<i64: 1>, scalar_prefetch = 0 : i64, scratch_operands = 0 : i64, tpu.core_type = #tpu.core_type<tc>, window_params = [{transform_indices = @transform_0, window_bounds = array<i64: 8, 4>}, {pipeline_mode = #tpu.pipeline_mode<synchronous>, transform_indices = @transform_1, window_bounds = array<i64: 4, 128>}, {pipeline_mode = #tpu.pipeline_mode<synchronous>, transform_indices = @transform_2, window_bounds = array<i64: 1, 128>}, {pipeline_mode = #tpu.pipeline_mode<synchronous>, transform_indices = @transform_3, window_bounds = array<i64: 128, 128>}, {pipeline_mode = #tpu.pipeline_mode<synchronous>, transform_indices = @transform_4, window_bounds = array<i64: 1, 128>}, {pipeline_mode = #tpu.pipeline_mode<synchronous>, transform_indices = @transform_5, window_bounds = array<i64: 1, 128>}, {pipeline_mode = #tpu.pipeline_mode<synchronous>, transform_indices = @transform_6, window_bounds = array<i64: 1, 1>}, {transform_indices = @transform_7, window_bounds = array<i64: 8, 1>}]} {
    %c0 = arith.constant 0 : index
    %c0_0 = arith.constant 0 : index
    %0 = vector.load %arg1[%c0, %c0_0] : memref<8x4xf32, #tpu.memory_space<vmem>>, vector<8x4xf32>
    %c0_1 = arith.constant 0 : index
    %c0_2 = arith.constant 0 : index
    %1 = vector.load %arg2[%c0_1, %c0_2] : memref<4x128xf32, #tpu.memory_space<vmem>>, vector<4x128xf32>
    %2 = vector.extract_strided_slice %0 {offsets = [0, 0], sizes = [8, 1], strides = [1, 1]} : vector<8x4xf32> to vector<8x1xf32>
    %3 = vector.extract_strided_slice %1 {offsets = [0, 0], sizes = [1, 128], strides = [1, 1]} : vector<4x128xf32> to vector<1x128xf32>
    %4 = vector.broadcast %2 : vector<8x1xf32> to vector<8x128xf32>
    %5 = vector.broadcast %3 : vector<1x128xf32> to vector<8x128xf32>
    %6 = arith.mulf %4, %5 : vector<8x128xf32>
    %7 = vector.extract_strided_slice %0 {offsets = [0, 1], sizes = [8, 1], strides = [1, 1]} : vector<8x4xf32> to vector<8x1xf32>
    %8 = vector.extract_strided_slice %1 {offsets = [1, 0], sizes = [1, 128], strides = [1, 1]} : vector<4x128xf32> to vector<1x128xf32>
    %9 = vector.broadcast %7 : vector<8x1xf32> to vector<8x128xf32>
    %10 = vector.broadcast %8 : vector<1x128xf32> to vector<8x128xf32>
    %11 = arith.mulf %9, %10 : vector<8x128xf32>
    %12 = arith.addf %6, %11 : vector<8x128xf32>
    %13 = vector.extract_strided_slice %0 {offsets = [0, 2], sizes = [8, 1], strides = [1, 1]} : vector<8x4xf32> to vector<8x1xf32>
    %14 = vector.extract_strided_slice %1 {offsets = [2, 0], sizes = [1, 128], strides = [1, 1]} : vector<4x128xf32> to vector<1x128xf32>
    %15 = vector.broadcast %13 : vector<8x1xf32> to vector<8x128xf32>
    %16 = vector.broadcast %14 : vector<1x128xf32> to vector<8x128xf32>
    %17 = arith.mulf %15, %16 : vector<8x128xf32>
    %18 = arith.addf %12, %17 : vector<8x128xf32>
    %19 = vector.extract_strided_slice %0 {offsets = [0, 3], sizes = [8, 1], strides = [1, 1]} : vector<8x4xf32> to vector<8x1xf32>
    %20 = vector.extract_strided_slice %1 {offsets = [3, 0], sizes = [1, 128], strides = [1, 1]} : vector<4x128xf32> to vector<1x128xf32>
    %21 = vector.broadcast %19 : vector<8x1xf32> to vector<8x128xf32>
    %22 = vector.broadcast %20 : vector<1x128xf32> to vector<8x128xf32>
    %23 = arith.mulf %21, %22 : vector<8x128xf32>
    %24 = arith.addf %18, %23 : vector<8x128xf32>
    %c0_3 = arith.constant 0 : index
    %c0_4 = arith.constant 0 : index
    %25 = vector.load %arg3[%c0_3, %c0_4] : memref<1x128xf32, #tpu.memory_space<vmem>>, vector<1x128xf32>
    %26 = vector.broadcast %25 : vector<1x128xf32> to vector<8x128xf32>
    %27 = arith.addf %24, %26 : vector<8x128xf32>
    %cst = arith.constant 0.000000e+00 : f32
    %28 = vector.broadcast %cst : f32 to vector<8x128xf32>
    %29 = arith.maximumf %27, %28 : vector<8x128xf32>
    %c0_5 = arith.constant 0 : index
    %c0_6 = arith.constant 0 : index
    %30 = vector.load %arg4[%c0_5, %c0_6] : memref<128x128xf32, #tpu.memory_space<vmem>>, vector<128x128xf32>
    %cst_7 = arith.constant dense<0.000000e+00> : vector<8x128xf32>
    %31 = tpu.matmul %29, %30, %cst_7 {dimension_numbers = #tpu.dot_dimension_numbers<[1], [0], [0], [1], [0, 0, 1, 1], [], []>} : vector<8x128xf32>, vector<128x128xf32>, vector<8x128xf32> -> vector<8x128xf32>
    %c0_8 = arith.constant 0 : index
    %c0_9 = arith.constant 0 : index
    %32 = vector.load %arg5[%c0_8, %c0_9] : memref<1x128xf32, #tpu.memory_space<vmem>>, vector<1x128xf32>
    %33 = vector.broadcast %32 : vector<1x128xf32> to vector<8x128xf32>
    %34 = arith.addf %31, %33 : vector<8x128xf32>
    %cst_10 = arith.constant 0.000000e+00 : f32
    %35 = vector.broadcast %cst_10 : f32 to vector<8x128xf32>
    %36 = arith.maximumf %34, %35 : vector<8x128xf32>
    %c0_11 = arith.constant 0 : index
    %c0_12 = arith.constant 0 : index
    %37 = vector.load %arg6[%c0_11, %c0_12] : memref<1x128xf32, #tpu.memory_space<vmem>>, vector<1x128xf32>
    %38 = vector.broadcast %37 : vector<1x128xf32> to vector<8x128xf32>
    %39 = arith.mulf %36, %38 : vector<8x128xf32>
    %cst_13 = arith.constant dense<0.000000e+00> : vector<8xf32>
    %40 = vector.multi_reduction <add>, %39, %cst_13 [1] : vector<8x128xf32> to vector<8xf32>
    %41 = vector.shape_cast %40 : vector<8xf32> to vector<8x1xf32>
    %c0_14 = arith.constant 0 : index
    %c0_15 = arith.constant 0 : index
    %42 = vector.load %arg7[%c0_14, %c0_15] : memref<1x1xf32, #tpu.memory_space<vmem>>, vector<1x1xf32>
    %43 = vector.broadcast %42 : vector<1x1xf32> to vector<8x1xf32>
    %44 = arith.addf %41, %43 : vector<8x1xf32>
    %c0_16 = arith.constant 0 : index
    %c0_17 = arith.constant 0 : index
    %45 = vector.load %arg8[%c0_16, %c0_17] : memref<8x1xf32, #tpu.memory_space<vmem>>, vector<8x1xf32>
    tpu.vector_store %arg8[%c0_16, %c0_17], %44 {strides = array<i32>} : memref<8x1xf32, #tpu.memory_space<vmem>>, vector<8x1xf32>,
    return
  }
  func.func @transform_0(%arg0: i32) -> (i32, i32) {
    %c0_i32 = arith.constant 0 : i32
    %c0_i32_0 = arith.constant 0 : i32
    return %arg0, %c0_i32 : i32, i32
  }
  func.func @transform_1(%arg0: i32) -> (i32, i32) {
    %c0_i32 = arith.constant 0 : i32
    %c0_i32_0 = arith.constant 0 : i32
    %c0_i32_1 = arith.constant 0 : i32
    return %c0_i32, %c0_i32_0 : i32, i32
  }
  func.func @transform_2(%arg0: i32) -> (i32, i32) {
    %c0_i32 = arith.constant 0 : i32
    %c0_i32_0 = arith.constant 0 : i32
    %c0_i32_1 = arith.constant 0 : i32
    return %c0_i32, %c0_i32_0 : i32, i32
  }
  func.func @transform_3(%arg0: i32) -> (i32, i32) {
    %c0_i32 = arith.constant 0 : i32
    %c0_i32_0 = arith.constant 0 : i32
    %c0_i32_1 = arith.constant 0 : i32
    return %c0_i32, %c0_i32_0 : i32, i32
  }
  func.func @transform_4(%arg0: i32) -> (i32, i32) {
    %c0_i32 = arith.constant 0 : i32
    %c0_i32_0 = arith.constant 0 : i32
    %c0_i32_1 = arith.constant 0 : i32
    return %c0_i32, %c0_i32_0 : i32, i32
  }
  func.func @transform_5(%arg0: i32) -> (i32, i32) {
    %c0_i32 = arith.constant 0 : i32
    %c0_i32_0 = arith.constant 0 : i32
    %c0_i32_1 = arith.constant 0 : i32
    return %c0_i32, %c0_i32_0 : i32, i32
  }
  func.func @transform_6(%arg0: i32) -> (i32, i32) {
    %c0_i32 = arith.constant 0 : i32
    %c0_i32_0 = arith.constant 0 : i32
    %c0_i32_1 = arith.constant 0 : i32
    return %c0_i32, %c0_i32_0 : i32, i32
  }
  func.func @transform_7(%arg0: i32) -> (i32, i32) {
    %c0_i32 = arith.constant 0 : i32
    %c0_i32_0 = arith.constant 0 : i32
    return %arg0, %c0_i32 : i32, i32
  }
}

</mosaic_0001>

<llo_original>
// kernel: tpu_custom_call.1
$region0: #{tpu_custom_call.1}
  #allocation0 [shape = 'u32[]', space=smem, size = 0x4, offset = 0x4, fixed_abs, tag = 'smem constant byte address 0x4 - core index']
  #allocation1 [shape = 'u32[72,128]{1,0:T(1,128)}', space=vmem, size = 0x9000, scoped, tag = 'internal scratch']
  #allocation2 [shape = 'f32[1,1]{1,0:T(1,128)S(1)}', space=vmem, size = 0x200, scoped, tag = 'scoped memory for tpu_custom_call.1']
  %s0 = inlined_call_operand.vmem [shape: f32[8,4], index: 0, kind: input, shape index: {}]
  %s1 = inlined_call_operand.vmem [shape: f32[4,128], index: 1, kind: input, shape index: {}]
  %s2 = inlined_call_operand.vmem [shape: f32[1,128], index: 2, kind: input, shape index: {}]
  %s3 = inlined_call_operand.hbm [shape: f32[128,128], index: 3, kind: input, shape index: {}]
  %s4 = inlined_call_operand.vmem [shape: f32[1,128], index: 4, kind: input, shape index: {}]
  %s5 = inlined_call_operand.vmem [shape: f32[1,128], index: 5, kind: input, shape index: {}]
  %s6 = inlined_call_operand.<no memory space> [shape: f32[1,1], index: 6, kind: input, shape index: {}]
  %s7 = inlined_call_operand.vmem [shape: f32[8,1], index: 7, kind: output, shape index: {}]
  %s8 = sld [smem:[#allocation0]]
  $region42: #{tpu_custom_call.1} parent=0
    _
  %s10 = ssub.s32 1, %s8
  %s11 = scalar_select 0, %s10, %s8
  %v12 = vstv %s6
  %13 = vst [vmem:[#allocation2] sm:$0x1] %v12
  $region1: #{tpu_custom_call.1} parent=0
    #allocation3 [shape = 'u8[65536]{0}', space=vmem, size = 0x10000, scoped, tag = 'input window, operand 3, single buffered']
    #allocation4 [shape = 's32[1]{0}', space=sflag, size = 0x4, scoped, tag = 'scoped memory for tpu_custom_call.1']
    %14 = vsyncpa [#allocation4], 0
    // Predicated region
    $region2: #{tpu_custom_call.1} parent=1 // pred_check
      _
    $region3: #{tpu_custom_call.1} parent=1 // pred_check_branch
      %16 = sbr.rel (0) target = $region5
    $region4: #{tpu_custom_call.1} parent=1 // pred_region
      _
    $region5: #{tpu_custom_call.1} parent=1 // pred_fallthru
      _
    // Predicated region
    $region6: #{tpu_custom_call.1} parent=1 // pred_check
      _
    $region7: #{tpu_custom_call.1} parent=1 // pred_check_branch
      %18 = sbr.rel (0) target = $region9
    $region8: #{tpu_custom_call.1} parent=1 // pred_region
      _
    $region9: #{tpu_custom_call.1} parent=1 // pred_fallthru
      _
    // Predicated region
    $region10: #{tpu_custom_call.1} parent=1 // pred_check
      _
    $region11: #{tpu_custom_call.1} parent=1 // pred_check_branch
      %20 = sbr.rel (0) target = $region13
    $region12: #{tpu_custom_call.1} parent=1 // pred_region
      _
    $region13: #{tpu_custom_call.1} parent=1 // pred_fallthru
      _
    // Predicated region
    $region14: #{tpu_custom_call.1} parent=1 // pred_check
      _
    $region15: #{tpu_custom_call.1} parent=1 // pred_check_branch
      %22 = sbr.rel (0) target = $region17
    $region16: #{tpu_custom_call.1} parent=1 // pred_region
      %24 = vsyncadd [#allocation4], 0
      %s25 = sshll.u32 %s3, 4
      %s26 = int_to_ptr.hbm [resolvable:$true] %s25
      %s27 = sshll.u32 [#allocation3], 4
      %s28 = int_to_ptr.vmem [resolvable:$true] %s27
      %33 = dma.hbm_to_vmem [thread:$0]  %s26, 2048, %s28, [#allocation4], 128, 128, 8
    $region17: #{tpu_custom_call.1} parent=1 // pred_fallthru
      _
    // Predicated region
    $region18: #{tpu_custom_call.1} parent=1 // pred_check
      _
    $region19: #{tpu_custom_call.1} parent=1 // pred_check_branch
      %35 = sbr.rel (0) target = $region21
    $region20: #{tpu_custom_call.1} parent=1 // pred_region
      _
    $region21: #{tpu_custom_call.1} parent=1 // pred_fallthru
      _
    // Predicated region
    $region22: #{tpu_custom_call.1} parent=1 // pred_check
      _
    $region23: #{tpu_custom_call.1} parent=1 // pred_check_branch
      %37 = sbr.rel (0) target = $region25
    $region24: #{tpu_custom_call.1} parent=1 // pred_region
      _
    $region25: #{tpu_custom_call.1} parent=1 // pred_fallthru
      _
    // Predicated region
    $region26: #{tpu_custom_call.1} parent=1 // pred_check
      _
    $region27: #{tpu_custom_call.1} parent=1 // pred_check_branch
      %39 = sbr.rel (0) target = $region29
    $region28: #{tpu_custom_call.1} parent=1 // pred_region
      _
    $region29: #{tpu_custom_call.1} parent=1 // pred_fallthru
      _
    // Predicated region
    $region30: #{tpu_custom_call.1} parent=1 // pred_check
      _
    $region31: #{tpu_custom_call.1} parent=1 // pred_check_branch
      %41 = sbr.rel (0) target = $region33
    $region32: #{tpu_custom_call.1} parent=1 // pred_region
      %43 = dma.done [#allocation4], 2048
    $region33: #{tpu_custom_call.1} parent=1 // pred_fallthru
      _
    %v44 = vld [vmem:[%s0] sm:$0xff]
    %v45 = vld [vmem:[%s1] sm:$0xf]
    %47 = vset.pattern.permute.xlu0 0
    %48 = vperm.xlu0 %47, %v44
    %v49 = vpop.permute.xlu0 %48
    %v51 = vperm.slane %v45, 0
    %v52 = vmul.f32 %v49, %v51
    %53 = vset.pattern.permute.xlu0 1
    %54 = vperm.xlu0 %53, %v44
    %v55 = vpop.permute.xlu0 %54
    %v57 = vperm.slane %v45, 1
    %v58 = vmul.f32 %v55, %v57
    %v59 = vadd.f32 %v52, %v58
    %60 = vset.pattern.permute.xlu0 2
    %61 = vperm.xlu0 %60, %v44
    %v62 = vpop.permute.xlu0 %61
    %v64 = vperm.slane %v45, 2
    %v65 = vmul.f32 %v62, %v64
    %v66 = vadd.f32 %v59, %v65
    %67 = vset.pattern.permute.xlu0 3
    %68 = vperm.xlu0 %67, %v44
    %v69 = vpop.permute.xlu0 %68
    %v71 = vperm.slane %v45, 3
    %v72 = vmul.f32 %v69, %v71
    %v73 = vadd.f32 %v66, %v72
    %v74 = vld [vmem:[%s2] sm:$0x1]
    %v76 = vperm.slane %v74, 0
    %v78 = vadd.f32 %v73, %v76
    %v79 = vmax.f32 %v78, 0.0
    %v80 = vld [vmem:[#allocation3] sm:$0xff]
    %v81 = vld [vmem:[#allocation3 + $0x8] sm:$0xff]
    %v82 = vld [vmem:[#allocation3 + $0x10] sm:$0xff]
    %v83 = vld [vmem:[#allocation3 + $0x18] sm:$0xff]
    %v84 = vld [vmem:[#allocation3 + $0x20] sm:$0xff]
    %v85 = vld [vmem:[#allocation3 + $0x28] sm:$0xff]
    %v86 = vld [vmem:[#allocation3 + $0x30] sm:$0xff]
    %v87 = vld [vmem:[#allocation3 + $0x38] sm:$0xff]
    %v88 = vld [vmem:[#allocation3 + $0x40] sm:$0xff]
    %v89 = vld [vmem:[#allocation3 + $0x48] sm:$0xff]
    %v90 = vld [vmem:[#allocation3 + $0x50] sm:$0xff]
    %v91 = vld [vmem:[#allocation3 + $0x58] sm:$0xff]
    %v92 = vld [vmem:[#allocation3 + $0x60] sm:$0xff]
    %v93 = vld [vmem:[#allocation3 + $0x68] sm:$0xff]
    %v94 = vld [vmem:[#allocation3 + $0x70] sm:$0xff]
    %v95 = vld [vmem:[#allocation3 + $0x78] sm:$0xff]
    %v96 = vld [vmem:[%s4] sm:$0x1]
    %v98 = vperm.slane %v96, 0
    %100 = vmatpush.msra.mxu0 %v95
    %101 = vmatpush.msra.mxu0 %v94
    %102 = vmatpush.msra.mxu0 %v93
    %103 = vmatpush.msra.mxu0 %v92
    %104 = vmatpush.msra.mxu0 %v91
    %105 = vmatpush.msra.mxu0 %v90
    %106 = vmatpush.msra.mxu0 %v89
    %107 = vmatpush.msra.mxu0 %v88
    %108 = vmatpush.msra.mxu0 %v87
    %109 = vmatpush.msra.mxu0 %v86
    %110 = vmatpush.msra.mxu0 %v85
    %111 = vmatpush.msra.mxu0 %v84
    %112 = vmatpush.msra.mxu0 %v83
    %113 = vmatpush.msra.mxu0 %v82
    %114 = vmatpush.msra.mxu0 %v81
    %115 = vmatpush.msra.mxu0 %v80
    %116 = vmatmul.f32.gmra.mxu0 %v79
    %v117 = vpop.f32.mrf.mxu0
    %v118 = vadd.f32 %v98, %v117
    %119 = vdwg.mxu0
    %v120 = vmax.f32 %v118, 0.0
    %v121 = vld [vmem:[%s5] sm:$0x1]
    %v123 = vperm.slane %v121, 0
    %v125 = vmul.f32 %v120, %v123
    %126 = vadd.xlane.f32.xlu0 %v125
    %v127 = vpop.xlane.xlu0 %126
    %v128 = vld [vmem:[#allocation2] sm:$0x1]
    %v130 = vperm.slane %v128, 0
    %v132 = vadd.f32 %v127, %v130
    %vm133 = vcmask 7168
    %134 = vst.msk [vmem:[%s7] sm:$0xff] %vm133, %v132
    // Predicated region
    $region34: #{tpu_custom_call.1} parent=1 // pred_check
      _
    $region35: #{tpu_custom_call.1} parent=1 // pred_check_branch
      %136 = sbr.rel (0) target = $region37
    $region36: #{tpu_custom_call.1} parent=1 // pred_region
      _
    $region37: #{tpu_custom_call.1} parent=1 // pred_fallthru
      _
    // Predicated region
    $region38: #{tpu_custom_call.1} parent=1 // pred_check
      _
    $region39: #{tpu_custom_call.1} parent=1 // pred_check_branch
      %138 = sbr.rel (0) target = $region41
    $region40: #{tpu_custom_call.1} parent=1 // pred_region
      _
    $region41: #{tpu_custom_call.1} parent=1 // pred_fallthru
      _
    %139 = vsyncpa [#allocation4], 1

</llo_original>
